<compile_context>
chip_gen: v7x
topology: tpu7x:2x2x1
jax: 0.10.0
libtpu: 0.0.40
codegen_flags: <defaults>
</compile_context>

<pallas_src>
import functools

import jax
import jax.numpy as jnp
from jax.experimental import pallas as pl
from jax.experimental.pallas import tpu as pltpu

D_IN, D_H1, D_H2, D_OUT = 20, 64, 32, 16


def nest_mlp_kernel(x_ref, w1_ref, b1_ref, w2_ref, b2_ref, w3_ref, b3_ref, o_ref):
    # Feature-major: x_ref is (D_IN, tb) with batch on the lane axis, so the three
    # MXU matmuls produce lane-dense (features x batch) tiles and the final store
    # to o_ref (D_OUT, tb) is unmasked / full-width.
    x = x_ref[...]
    h1 = jnp.dot(w1_ref[...], x, preferred_element_type=jnp.float32) + b1_ref[...]
    h1 = jnp.maximum(h1, 0.0)
    h2 = jnp.dot(w2_ref[...], h1, preferred_element_type=jnp.float32) + b2_ref[...]
    h2 = jnp.maximum(h2, 0.0)
    out = jnp.dot(w3_ref[...], h2, preferred_element_type=jnp.float32) + b3_ref[...]
    o_ref[...] = out.astype(o_ref.dtype)


def _round_up(n, m):
    return ((n + m - 1) // m) * m


def _choose_tile(batch, tile_b):
    # Small batches: a single full block (block dims equal to the array dims are
    # legal even when not multiples of 128).
    if batch <= 256:
        return batch
    # Large batches: lane tile must be a multiple of 128.  Keep >= 2 grid steps so
    # the "parallel" batch axis can shard across v7x's two TensorCores.
    return min(tile_b, _round_up(pl.cdiv(batch, 2), 128))


@functools.partial(jax.jit, static_argnames=("tile_b",))
def nest_mlp_fm(x_fm, params, *, tile_b=16384):
    """Fast path. x_fm: (D_IN, B) float32, feature-major (batch on lanes).

    Returns (D_OUT, B).  Weights are PyTorch layout (out, in); biases are (out, 1).
    """
    B = x_fm.shape[1]
    w1, b1 = params["w1"], params["b1"]
    w2, b2 = params["w2"], params["b2"]
    w3, b3 = params["w3"], params["b3"]

    tb = _choose_tile(B, tile_b)
    grid_b = pl.cdiv(B, tb)  # ragged last block handled by Pallas; no jnp.pad pre-pass

    # x / out tiled over the batch (lane) axis; weights & biases resident in VMEM.
    x_spec = pl.BlockSpec((D_IN, tb), lambda i: (0, i))
    o_spec = pl.BlockSpec((D_OUT, tb), lambda i: (0, i))
    resident = lambda a: pl.BlockSpec(a.shape, lambda i: (0, 0))

    flops = 2 * B * (D_IN * D_H1 + D_H1 * D_H2 + D_H2 * D_OUT)
    weight_bytes = sum(int(a.size) * a.dtype.itemsize for a in (w1, b1, w2, b2, w3, b3))
    bytes_accessed = B * (D_IN + D_OUT) * x_fm.dtype.itemsize + weight_bytes

    return pl.pallas_call(
        nest_mlp_kernel,
        out_shape=jax.ShapeDtypeStruct((D_OUT, B), x_fm.dtype),
        grid=(grid_b,),
        in_specs=[
            x_spec,
            resident(w1), resident(b1),
            resident(w2), resident(b2),
            resident(w3), resident(b3),
        ],
        out_specs=o_spec,
        compiler_params=pltpu.CompilerParams(
            dimension_semantics=("parallel",),
            vmem_limit_bytes=48 << 20,
        ),
        cost_estimate=pl.CostEstimate(
            flops=flops, transcendentals=0, bytes_accessed=bytes_accessed),
    )(x_fm, w1, b1, w2, b2, w3, b3)


@functools.partial(jax.jit, static_argnames=("tile_b",))
def nest_mlp(x, params, *, tile_b=16384):
    """PyTorch-interface wrapper: x is (B, D_IN), returns (B, D_OUT).

    The two transposes are wrapper-side XLA ops (extra HBM passes over the narrow
    20/16-wide activations); keep data feature-major and call nest_mlp_fm directly
    where performance matters.
    """
    return nest_mlp_fm(x.T, params, tile_b=tile_b).T


def init_params(key):
    """PyTorch-style init: W ~ U(-1/sqrt(fan_in), 1/sqrt(fan_in)), shape (out, in);
    biases shaped (out, 1) for lane-broadcast inside the kernel."""
    dims = [(D_IN, D_H1), (D_H1, D_H2), (D_H2, D_OUT)]
    params = {}
    for i, (fan_in, fan_out) in enumerate(dims, start=1):
        key, kw, kb = jax.random.split(key, 3)
        bound = 1.0 / jnp.sqrt(fan_in)
        params[f"w{i}"] = jax.random.uniform(
            kw, (fan_out, fan_in), jnp.float32, -bound, bound)
        params[f"b{i}"] = jax.random.uniform(
            kb, (fan_out, 1), jnp.float32, -bound, bound)
    return params


def nest_mlp_ref(x, params):
    """Batch-first reference with PyTorch semantics (y = x @ W.T + b)."""
    h1 = jnp.maximum(x @ params["w1"].T + params["b1"].T, 0.0)
    h2 = jnp.maximum(h1 @ params["w2"].T + params["b2"].T, 0.0)
    return h2 @ params["w3"].T + params["b3"].T


if __name__ == "__main__":
    key = jax.random.PRNGKey(0)
    key, kx = jax.random.split(key)
    params = init_params(key)

    # Small batch-first input through the PyTorch-compatible interface.
    B = 8
    x = jax.random.normal(kx, (B, D_IN), jnp.float32)
    out = jax.block_until_ready(nest_mlp(x, params))
    ref = nest_mlp_ref(x, params)
    assert out.shape == (B, D_OUT)
    assert jnp.allclose(out, ref, atol=1e-5, rtol=1e-5)

    # Feature-major fast path: multi-tile grid with a ragged last block
    # (no pre-pad; OOB output lanes are discarded by Pallas).
    B2 = 1000
    x2_fm = jax.random.normal(jax.random.PRNGKey(1), (D_IN, B2), jnp.float32)
    out2 = jax.block_until_ready(nest_mlp_fm(x2_fm, params, tile_b=512))
    assert out2.shape == (D_OUT, B2)
    assert jnp.allclose(out2.T, nest_mlp_ref(x2_fm.T, params), atol=1e-5, rtol=1e-5)

    print("KERNEL_OK")
</pallas_src>

<mosaic_0001>
module attributes {stable_mosaic.version = 11 : i64} {
  func.func @nest_mlp_kernel(%arg0: i32, %arg1: memref<20x8xf32, #tpu.memory_space<vmem>>, %arg2: memref<64x20xf32, #tpu.memory_space<vmem>>, %arg3: memref<64x1xf32, #tpu.memory_space<vmem>>, %arg4: memref<32x64xf32, #tpu.memory_space<vmem>>, %arg5: memref<32x1xf32, #tpu.memory_space<vmem>>, %arg6: memref<16x32xf32, #tpu.memory_space<vmem>>, %arg7: memref<16x1xf32, #tpu.memory_space<vmem>>, %arg8: memref<16x8xf32, #tpu.memory_space<vmem>>) attributes {dimension_semantics = [#tpu.dimension_semantics<parallel>], iteration_bounds = array<i64: 1>, scalar_prefetch = 0 : i64, scratch_operands = 0 : i64, tpu.core_type = #tpu.core_type<tc>, window_params = [{transform_indices = @transform_0, window_bounds = array<i64: 20, 8>}, {pipeline_mode = #tpu.pipeline_mode<synchronous>, transform_indices = @transform_1, window_bounds = array<i64: 64, 20>}, {pipeline_mode = #tpu.pipeline_mode<synchronous>, transform_indices = @transform_2, window_bounds = array<i64: 64, 1>}, {pipeline_mode = #tpu.pipeline_mode<synchronous>, transform_indices = @transform_3, window_bounds = array<i64: 32, 64>}, {pipeline_mode = #tpu.pipeline_mode<synchronous>, transform_indices = @transform_4, window_bounds = array<i64: 32, 1>}, {pipeline_mode = #tpu.pipeline_mode<synchronous>, transform_indices = @transform_5, window_bounds = array<i64: 16, 32>}, {pipeline_mode = #tpu.pipeline_mode<synchronous>, transform_indices = @transform_6, window_bounds = array<i64: 16, 1>}, {transform_indices = @transform_7, window_bounds = array<i64: 16, 8>}]} {
    %c0 = arith.constant 0 : index
    %c0_0 = arith.constant 0 : index
    %0 = vector.load %arg1[%c0, %c0_0] : memref<20x8xf32, #tpu.memory_space<vmem>>, vector<20x8xf32>
    %c0_1 = arith.constant 0 : index
    %c0_2 = arith.constant 0 : index
    %1 = vector.load %arg2[%c0_1, %c0_2] : memref<64x20xf32, #tpu.memory_space<vmem>>, vector<64x20xf32>
    %cst = arith.constant dense<0.000000e+00> : vector<64x8xf32>
    %2 = tpu.matmul %1, %0, %cst {dimension_numbers = #tpu.dot_dimension_numbers<[1], [0], [0], [1], [0, 0, 1, 1], [], []>} : vector<64x20xf32>, vector<20x8xf32>, vector<64x8xf32> -> vector<64x8xf32>
    %c0_3 = arith.constant 0 : index
    %c0_4 = arith.constant 0 : index
    %3 = vector.load %arg3[%c0_3, %c0_4] : memref<64x1xf32, #tpu.memory_space<vmem>>, vector<64x1xf32>
    %4 = vector.broadcast %3 : vector<64x1xf32> to vector<64x8xf32>
    %5 = arith.addf %2, %4 : vector<64x8xf32>
    %cst_5 = arith.constant 0.000000e+00 : f32
    %6 = vector.broadcast %cst_5 : f32 to vector<64x8xf32>
    %7 = arith.maximumf %5, %6 : vector<64x8xf32>
    %c0_6 = arith.constant 0 : index
    %c0_7 = arith.constant 0 : index
    %8 = vector.load %arg4[%c0_6, %c0_7] : memref<32x64xf32, #tpu.memory_space<vmem>>, vector<32x64xf32>
    %cst_8 = arith.constant dense<0.000000e+00> : vector<32x8xf32>
    %9 = tpu.matmul %8, %7, %cst_8 {dimension_numbers = #tpu.dot_dimension_numbers<[1], [0], [0], [1], [0, 0, 1, 1], [], []>} : vector<32x64xf32>, vector<64x8xf32>, vector<32x8xf32> -> vector<32x8xf32>
    %c0_9 = arith.constant 0 : index
    %c0_10 = arith.constant 0 : index
    %10 = vector.load %arg5[%c0_9, %c0_10] : memref<32x1xf32, #tpu.memory_space<vmem>>, vector<32x1xf32>
    %11 = vector.broadcast %10 : vector<32x1xf32> to vector<32x8xf32>
    %12 = arith.addf %9, %11 : vector<32x8xf32>
    %cst_11 = arith.constant 0.000000e+00 : f32
    %13 = vector.broadcast %cst_11 : f32 to vector<32x8xf32>
    %14 = arith.maximumf %12, %13 : vector<32x8xf32>
    %c0_12 = arith.constant 0 : index
    %c0_13 = arith.constant 0 : index
    %15 = vector.load %arg6[%c0_12, %c0_13] : memref<16x32xf32, #tpu.memory_space<vmem>>, vector<16x32xf32>
    %cst_14 = arith.constant dense<0.000000e+00> : vector<16x8xf32>
    %16 = tpu.matmul %15, %14, %cst_14 {dimension_numbers = #tpu.dot_dimension_numbers<[1], [0], [0], [1], [0, 0, 1, 1], [], []>} : vector<16x32xf32>, vector<32x8xf32>, vector<16x8xf32> -> vector<16x8xf32>
    %c0_15 = arith.constant 0 : index
    %c0_16 = arith.constant 0 : index
    %17 = vector.load %arg7[%c0_15, %c0_16] : memref<16x1xf32, #tpu.memory_space<vmem>>, vector<16x1xf32>
    %18 = vector.broadcast %17 : vector<16x1xf32> to vector<16x8xf32>
    %19 = arith.addf %16, %18 : vector<16x8xf32>
    %c0_17 = arith.constant 0 : index
    %c0_18 = arith.constant 0 : index
    %20 = vector.load %arg8[%c0_17, %c0_18] : memref<16x8xf32, #tpu.memory_space<vmem>>, vector<16x8xf32>
    tpu.vector_store %arg8[%c0_17, %c0_18], %19 {strides = array<i32>} : memref<16x8xf32, #tpu.memory_space<vmem>>, vector<16x8xf32>,
    return
  }
  func.func @transform_0(%arg0: i32) -> (i32, i32) {
    %c0_i32 = arith.constant 0 : i32
    %c0_i32_0 = arith.constant 0 : i32
    return %c0_i32, %arg0 : i32, i32
  }
  func.func @transform_1(%arg0: i32) -> (i32, i32) {
    %c0_i32 = arith.constant 0 : i32
    %c0_i32_0 = arith.constant 0 : i32
    %c0_i32_1 = arith.constant 0 : i32
    return %c0_i32, %c0_i32_0 : i32, i32
  }
  func.func @transform_2(%arg0: i32) -> (i32, i32) {
    %c0_i32 = arith.constant 0 : i32
    %c0_i32_0 = arith.constant 0 : i32
    %c0_i32_1 = arith.constant 0 : i32
    return %c0_i32, %c0_i32_0 : i32, i32
  }
  func.func @transform_3(%arg0: i32) -> (i32, i32) {
    %c0_i32 = arith.constant 0 : i32
    %c0_i32_0 = arith.constant 0 : i32
    %c0_i32_1 = arith.constant 0 : i32
    return %c0_i32, %c0_i32_0 : i32, i32
  }
  func.func @transform_4(%arg0: i32) -> (i32, i32) {
    %c0_i32 = arith.constant 0 : i32
    %c0_i32_0 = arith.constant 0 : i32
    %c0_i32_1 = arith.constant 0 : i32
    return %c0_i32, %c0_i32_0 : i32, i32
  }
  func.func @transform_5(%arg0: i32) -> (i32, i32) {
    %c0_i32 = arith.constant 0 : i32
    %c0_i32_0 = arith.constant 0 : i32
    %c0_i32_1 = arith.constant 0 : i32
    return %c0_i32, %c0_i32_0 : i32, i32
  }
  func.func @transform_6(%arg0: i32) -> (i32, i32) {
    %c0_i32 = arith.constant 0 : i32
    %c0_i32_0 = arith.constant 0 : i32
    %c0_i32_1 = arith.constant 0 : i32
    return %c0_i32, %c0_i32_0 : i32, i32
  }
  func.func @transform_7(%arg0: i32) -> (i32, i32) {
    %c0_i32 = arith.constant 0 : i32
    %c0_i32_0 = arith.constant 0 : i32
    return %c0_i32, %arg0 : i32, i32
  }
}

</mosaic_0001>

<llo_original>
// kernel: nest_mlp_fm.1
$region0: #{nest_mlp_fm.1}
  #allocation0 [shape = 'u32[]', space=smem, size = 0x4, offset = 0x4, fixed_abs, tag = 'smem constant byte address 0x4 - core index']
  #allocation1 [shape = 'u32[144,128]{1,0:T(1,128)}', space=vmem, size = 0x12000, scoped, tag = 'internal scratch']
  %s0 = inlined_call_operand.vmem [shape: f32[20,8], index: 0, kind: input, shape index: {}]
  %s1 = inlined_call_operand.vmem [shape: f32[64,20], index: 1, kind: input, shape index: {}]
  %s2 = inlined_call_operand.vmem [shape: f32[64,1], index: 2, kind: input, shape index: {}]
  %s3 = inlined_call_operand.vmem [shape: f32[32,64], index: 3, kind: input, shape index: {}]
  %s4 = inlined_call_operand.vmem [shape: f32[32,1], index: 4, kind: input, shape index: {}]
  %s5 = inlined_call_operand.vmem [shape: f32[16,32], index: 5, kind: input, shape index: {}]
  %s6 = inlined_call_operand.vmem [shape: f32[16,1], index: 6, kind: input, shape index: {}]
  %s7 = inlined_call_operand.vmem [shape: f32[16,8], index: 7, kind: output, shape index: {}]
  %s8 = sld [smem:[#allocation0]]
  $region38: #{nest_mlp_fm.1} parent=0
    _
  %s10 = ssub.s32 1, %s8
  %s11 = scalar_select 0, %s10, %s8
  // Predicated region
  $region2: #{nest_mlp_fm.1} parent=0 // pred_check
    _
  $region3: #{nest_mlp_fm.1} parent=0 // pred_check_branch
    %13 = sbr.rel (0) target = $region5
  $region4: #{nest_mlp_fm.1} parent=0 // pred_region
    _
  $region5: #{nest_mlp_fm.1} parent=0 // pred_fallthru
    _
  // Predicated region
  $region6: #{nest_mlp_fm.1} parent=0 // pred_check
    _
  $region7: #{nest_mlp_fm.1} parent=0 // pred_check_branch
    %15 = sbr.rel (0) target = $region9
  $region8: #{nest_mlp_fm.1} parent=0 // pred_region
    _
  $region9: #{nest_mlp_fm.1} parent=0 // pred_fallthru
    _
  // Predicated region
  $region10: #{nest_mlp_fm.1} parent=0 // pred_check
    _
  $region11: #{nest_mlp_fm.1} parent=0 // pred_check_branch
    %17 = sbr.rel (0) target = $region13
  $region12: #{nest_mlp_fm.1} parent=0 // pred_region
    _
  $region13: #{nest_mlp_fm.1} parent=0 // pred_fallthru
    _
  // Predicated region
  $region14: #{nest_mlp_fm.1} parent=0 // pred_check
    _
  $region15: #{nest_mlp_fm.1} parent=0 // pred_check_branch
    %19 = sbr.rel (0) target = $region17
  $region16: #{nest_mlp_fm.1} parent=0 // pred_region
    _
  $region17: #{nest_mlp_fm.1} parent=0 // pred_fallthru
    _
  // Predicated region
  $region18: #{nest_mlp_fm.1} parent=0 // pred_check
    _
  $region19: #{nest_mlp_fm.1} parent=0 // pred_check_branch
    %21 = sbr.rel (0) target = $region21
  $region20: #{nest_mlp_fm.1} parent=0 // pred_region
    _
  $region21: #{nest_mlp_fm.1} parent=0 // pred_fallthru
    _
  // Predicated region
  $region22: #{nest_mlp_fm.1} parent=0 // pred_check
    _
  $region23: #{nest_mlp_fm.1} parent=0 // pred_check_branch
    %23 = sbr.rel (0) target = $region25
  $region24: #{nest_mlp_fm.1} parent=0 // pred_region
    _
  $region25: #{nest_mlp_fm.1} parent=0 // pred_fallthru
    _
  // Predicated region
  $region26: #{nest_mlp_fm.1} parent=0 // pred_check
    _
  $region27: #{nest_mlp_fm.1} parent=0 // pred_check_branch
    %25 = sbr.rel (0) target = $region29
  $region28: #{nest_mlp_fm.1} parent=0 // pred_region
    _
  $region29: #{nest_mlp_fm.1} parent=0 // pred_fallthru
    _
  %v26 = vld [vmem:[%s0] sm:$0xff]
  %v27 = vld [vmem:[%s0 + $0x8] sm:$0xff]
  %v28 = vld [vmem:[%s0 + $0x10] sm:$0xf]
  %v29 = vld [vmem:[%s1] sm:$0xff]
  %v30 = vld [vmem:[%s1 + $0x8] sm:$0xff]
  %v31 = vld [vmem:[%s1 + $0x10] sm:$0xff]
  %v32 = vld [vmem:[%s1 + $0x18] sm:$0xff]
  %v33 = vld [vmem:[%s1 + $0x20] sm:$0xff]
  %v34 = vld [vmem:[%s1 + $0x28] sm:$0xff]
  %v35 = vld [vmem:[%s1 + $0x30] sm:$0xff]
  %v36 = vld [vmem:[%s1 + $0x38] sm:$0xff]
  %v37 = vld [vmem:[%s2] sm:$0xff]
  %v38 = vld [vmem:[%s2 + $0x8] sm:$0xff]
  %v39 = vld [vmem:[%s2 + $0x10] sm:$0xff]
  %v40 = vld [vmem:[%s2 + $0x18] sm:$0xff]
  %v41 = vld [vmem:[%s2 + $0x20] sm:$0xff]
  %v42 = vld [vmem:[%s2 + $0x28] sm:$0xff]
  %v43 = vld [vmem:[%s2 + $0x30] sm:$0xff]
  %v44 = vld [vmem:[%s2 + $0x38] sm:$0xff]
  %46 = vset.pattern.permute.xlu0 0
  %47 = vperm.xlu0 %46, %v37
  %v48 = vpop.permute.xlu0 %47
  %51 = vset.pattern.permute.xlu0 0
  %52 = vperm.xlu0 %51, %v38
  %v53 = vpop.permute.xlu0 %52
  %56 = vset.pattern.permute.xlu0 0
  %57 = vperm.xlu0 %56, %v39
  %v58 = vpop.permute.xlu0 %57
  %61 = vset.pattern.permute.xlu0 0
  %62 = vperm.xlu0 %61, %v40
  %v63 = vpop.permute.xlu0 %62
  %66 = vset.pattern.permute.xlu0 0
  %67 = vperm.xlu0 %66, %v41
  %v68 = vpop.permute.xlu0 %67
  %71 = vset.pattern.permute.xlu0 0
  %72 = vperm.xlu0 %71, %v42
  %v73 = vpop.permute.xlu0 %72
  %76 = vset.pattern.permute.xlu0 0
  %77 = vperm.xlu0 %76, %v43
  %v78 = vpop.permute.xlu0 %77
  %81 = vset.pattern.permute.xlu0 0
  %82 = vperm.xlu0 %81, %v44
  %v83 = vpop.permute.xlu0 %82
  %vm85 = vcmask 162816
  %v87 = vsel %vm85, %v29, 0
  %v90 = vsel %vm85, %v30, 0
  %v93 = vsel %vm85, %v31, 0
  %v96 = vsel %vm85, %v32, 0
  %v99 = vsel %vm85, %v33, 0
  %v102 = vsel %vm85, %v34, 0
  %v105 = vsel %vm85, %v35, 0
  %v108 = vsel %vm85, %v36, 0
  %vm110 = vcmask 1043456
  %v112 = vsel %vm110, %v28, 0
  %114 = vmatprep.subr.mxu0 0.0
  %115 = vmatpush1.msra.mxu0 %v26
  %116 = vmatprep.subr.mxu0 0.0
  %117 = vmatpush1.msra.mxu0 %v27
  %118 = vmatprep.subr.mxu0 0.0
  %119 = vmatpush1.msra.mxu0 %v112
  %120 = vmatprep.subr.mxu0 0.0
  %121 = vmatpush1.msra.mxu0 0.0
  %122 = vmatprep.subr.mxu0 0.0
  %123 = vmatpush1.msra.mxu0 0.0
  %124 = vmatprep.subr.mxu0 0.0
  %125 = vmatpush1.msra.mxu0 0.0
  %126 = vmatprep.subr.mxu0 0.0
  %127 = vmatpush1.msra.mxu0 0.0
  %128 = vmatprep.subr.mxu0 0.0
  %129 = vmatpush1.msra.mxu0 0.0
  %130 = vmatprep.subr.mxu0 0.0
  %131 = vmatpush1.msra.mxu0 0.0
  %132 = vmatprep.subr.mxu0 0.0
  %133 = vmatpush1.msra.mxu0 0.0
  %134 = vmatprep.subr.mxu0 0.0
  %135 = vmatpush1.msra.mxu0 0.0
  %136 = vmatprep.subr.mxu0 0.0
  %137 = vmatpush1.msra.mxu0 0.0
  %138 = vmatprep.subr.mxu0 0.0
  %139 = vmatpush1.msra.mxu0 0.0
  %140 = vmatprep.subr.mxu0 0.0
  %141 = vmatpush1.msra.mxu0 0.0
  %142 = vmatprep.subr.mxu0 0.0
  %143 = vmatpush1.msra.mxu0 0.0
  %144 = vmatprep.subr.mxu0 0.0
  %145 = vmatpush1.msra.mxu0 0.0
  %146 = vmatprep.subr.mxu0 0.0
  %147 = vmatpush1.msra.mxu0 0.0
  %148 = vmatprep.subr.mxu0 0.0
  %149 = vmatpush1.msra.mxu0 0.0
  %150 = vmatprep.subr.mxu0 0.0
  %151 = vmatpush1.msra.mxu0 0.0
  %152 = vmatprep.subr.mxu0 0.0
  %153 = vmatpush1.msra.mxu0 0.0
  %154 = vmatprep.subr.mxu0 0.0
  %155 = vmatpush1.msra.mxu0 0.0
  %156 = vmatprep.subr.mxu0 0.0
  %157 = vmatpush1.msra.mxu0 0.0
  %158 = vmatprep.subr.mxu0 0.0
  %159 = vmatpush1.msra.mxu0 0.0
  %160 = vmatprep.subr.mxu0 0.0
  %161 = vmatpush1.msra.mxu0 0.0
  %162 = vmatprep.subr.mxu0 0.0
  %163 = vmatpush1.msra.mxu0 0.0
  %164 = vmatprep.subr.mxu0 0.0
  %165 = vmatpush1.msra.mxu0 0.0
  %166 = vmatprep.subr.mxu0 0.0
  %167 = vmatpush1.msra.mxu0 0.0
  %168 = vmatprep.subr.mxu0 0.0
  %169 = vmatpush1.msra.mxu0 0.0
  %170 = vmatprep.subr.mxu0 0.0
  %171 = vmatpush1.msra.mxu0 0.0
  %172 = vmatprep.subr.mxu0 0.0
  %173 = vmatpush1.msra.mxu0 0.0
  %174 = vmatprep.subr.mxu0 0.0
  %175 = vmatpush1.msra.mxu0 0.0
  %176 = vmatprep.subr.mxu0 0.0
  %177 = vmatpush1.msra.mxu0 0.0
  %178 = vmatprep.mubr.f32.mxu0 0.0
  %179 = vmatmul.mubr.f32.gmra.mrb[0].mxu0 %v87
  %v180 = vpop.f32.mrb[0].mxu0
  %v181 = vadd.f32 %v48, %v180
  %v182 = vpop.f32.mrb[0].mxu0
  %183 = vmatprep.mubr.f32.mxu0 0.0
  %184 = vmatmul.mubr.f32.gmra.mrb[0].mxu0 %v90
  %v185 = vpop.f32.mrb[0].mxu0
  %v186 = vadd.f32 %v53, %v185
  %v187 = vpop.f32.mrb[0].mxu0
  %188 = vmatprep.mubr.f32.mxu0 0.0
  %189 = vmatmul.mubr.f32.gmra.mrb[0].mxu0 %v93
  %v190 = vpop.f32.mrb[0].mxu0
  %v191 = vadd.f32 %v58, %v190
  %v192 = vpop.f32.mrb[0].mxu0
  %193 = vmatprep.mubr.f32.mxu0 0.0
  %194 = vmatmul.mubr.f32.gmra.mrb[0].mxu0 %v96
  %v195 = vpop.f32.mrb[0].mxu0
  %v196 = vadd.f32 %v63, %v195
  %v197 = vpop.f32.mrb[0].mxu0
  %198 = vmatprep.mubr.f32.mxu0 0.0
  %199 = vmatmul.mubr.f32.gmra.mrb[0].mxu0 %v99
  %v200 = vpop.f32.mrb[0].mxu0
  %v201 = vadd.f32 %v68, %v200
  %v202 = vpop.f32.mrb[0].mxu0
  %203 = vmatprep.mubr.f32.mxu0 0.0
  %204 = vmatmul.mubr.f32.gmra.mrb[0].mxu0 %v102
  %v205 = vpop.f32.mrb[0].mxu0
  %v206 = vadd.f32 %v73, %v205
  %v207 = vpop.f32.mrb[0].mxu0
  %208 = vmatprep.mubr.f32.mxu0 0.0
  %209 = vmatmul.mubr.f32.gmra.mrb[0].mxu0 %v105
  %v210 = vpop.f32.mrb[0].mxu0
  %v211 = vadd.f32 %v78, %v210
  %v212 = vpop.f32.mrb[0].mxu0
  %213 = vmatprep.mubr.f32.mxu0 0.0
  %214 = vmatmul.mubr.f32.gmra.mrb[0].mxu0 %v108
  %v215 = vpop.f32.mrb[0].mxu0
  %v216 = vadd.f32 %v83, %v215
  %v217 = vpop.f32.mrb[0].mxu0
  %218 = vdwg.mxu0
  %v219 = vmax.f32 %v181, 0.0
  %v220 = vmax.f32 %v186, 0.0
  %v221 = vmax.f32 %v191, 0.0
  %v222 = vmax.f32 %v196, 0.0
  %v223 = vmax.f32 %v201, 0.0
  %v224 = vmax.f32 %v206, 0.0
  %v225 = vmax.f32 %v211, 0.0
  %v226 = vmax.f32 %v216, 0.0
  %v227 = vld [vmem:[%s3] sm:$0xff]
  %v228 = vld [vmem:[%s3 + $0x8] sm:$0xff]
  %v229 = vld [vmem:[%s3 + $0x10] sm:$0xff]
  %v230 = vld [vmem:[%s3 + $0x18] sm:$0xff]
  %v231 = vld [vmem:[%s4] sm:$0xff]
  %v232 = vld [vmem:[%s4 + $0x8] sm:$0xff]
  %v233 = vld [vmem:[%s4 + $0x10] sm:$0xff]
  %v234 = vld [vmem:[%s4 + $0x18] sm:$0xff]
  %236 = vset.pattern.permute.xlu0 0
  %237 = vperm.xlu0 %236, %v231
  %v238 = vpop.permute.xlu0 %237
  %241 = vset.pattern.permute.xlu0 0
  %242 = vperm.xlu0 %241, %v232
  %v243 = vpop.permute.xlu0 %242
  %246 = vset.pattern.permute.xlu0 0
  %247 = vperm.xlu0 %246, %v233
  %v248 = vpop.permute.xlu0 %247
  %251 = vset.pattern.permute.xlu0 0
  %252 = vperm.xlu0 %251, %v234
  %v253 = vpop.permute.xlu0 %252
  %vm255 = vcmask 523264
  %v257 = vsel %vm255, %v227, 0
  %v260 = vsel %vm255, %v228, 0
  %v263 = vsel %vm255, %v229, 0
  %v266 = vsel %vm255, %v230, 0
  %268 = vmatprep.subr.mxu0 0.0
  %269 = vmatpush1.msra.mxu0 %v219
  %270 = vmatprep.subr.mxu0 0.0
  %271 = vmatpush1.msra.mxu0 %v220
  %272 = vmatprep.subr.mxu0 0.0
  %273 = vmatpush1.msra.mxu0 %v221
  %274 = vmatprep.subr.mxu0 0.0
  %275 = vmatpush1.msra.mxu0 %v222
  %276 = vmatprep.subr.mxu0 0.0
  %277 = vmatpush1.msra.mxu0 %v223
  %278 = vmatprep.subr.mxu0 0.0
  %279 = vmatpush1.msra.mxu0 %v224
  %280 = vmatprep.subr.mxu0 0.0
  %281 = vmatpush1.msra.mxu0 %v225
  %282 = vmatprep.subr.mxu0 0.0
  %283 = vmatpush1.msra.mxu0 %v226
  %284 = vmatprep.subr.mxu0 0.0
  %285 = vmatpush1.msra.mxu0 0.0
  %286 = vmatprep.subr.mxu0 0.0
  %287 = vmatpush1.msra.mxu0 0.0
  %288 = vmatprep.subr.mxu0 0.0
  %289 = vmatpush1.msra.mxu0 0.0
  %290 = vmatprep.subr.mxu0 0.0
  %291 = vmatpush1.msra.mxu0 0.0
  %292 = vmatprep.subr.mxu0 0.0
  %293 = vmatpush1.msra.mxu0 0.0
  %294 = vmatprep.subr.mxu0 0.0
  %295 = vmatpush1.msra.mxu0 0.0
  %296 = vmatprep.subr.mxu0 0.0
  %297 = vmatpush1.msra.mxu0 0.0
  %298 = vmatprep.subr.mxu0 0.0
  %299 = vmatpush1.msra.mxu0 0.0
  %300 = vmatprep.subr.mxu0 0.0
  %301 = vmatpush1.msra.mxu0 0.0
  %302 = vmatprep.subr.mxu0 0.0
  %303 = vmatpush1.msra.mxu0 0.0
  %304 = vmatprep.subr.mxu0 0.0
  %305 = vmatpush1.msra.mxu0 0.0
  %306 = vmatprep.subr.mxu0 0.0
  %307 = vmatpush1.msra.mxu0 0.0
  %308 = vmatprep.subr.mxu0 0.0
  %309 = vmatpush1.msra.mxu0 0.0
  %310 = vmatprep.subr.mxu0 0.0
  %311 = vmatpush1.msra.mxu0 0.0
  %312 = vmatprep.subr.mxu0 0.0
  %313 = vmatpush1.msra.mxu0 0.0
  %314 = vmatprep.subr.mxu0 0.0
  %315 = vmatpush1.msra.mxu0 0.0
  %316 = vmatprep.subr.mxu0 0.0
  %317 = vmatpush1.msra.mxu0 0.0
  %318 = vmatprep.subr.mxu0 0.0
  %319 = vmatpush1.msra.mxu0 0.0
  %320 = vmatprep.subr.mxu0 0.0
  %321 = vmatpush1.msra.mxu0 0.0
  %322 = vmatprep.subr.mxu0 0.0
  %323 = vmatpush1.msra.mxu0 0.0
  %324 = vmatprep.subr.mxu0 0.0
  %325 = vmatpush1.msra.mxu0 0.0
  %326 = vmatprep.subr.mxu0 0.0
  %327 = vmatpush1.msra.mxu0 0.0
  %328 = vmatprep.subr.mxu0 0.0
  %329 = vmatpush1.msra.mxu0 0.0
  %330 = vmatprep.subr.mxu0 0.0
  %331 = vmatpush1.msra.mxu0 0.0
  %332 = vmatprep.mubr.f32.mxu0 0.0
  %333 = vmatmul.mubr.f32.gmra.mrb[0].mxu0 %v257
  %v334 = vpop.f32.mrb[0].mxu0
  %v335 = vadd.f32 %v238, %v334
  %v336 = vpop.f32.mrb[0].mxu0
  %337 = vmatprep.mubr.f32.mxu0 0.0
  %338 = vmatmul.mubr.f32.gmra.mrb[0].mxu0 %v260
  %v339 = vpop.f32.mrb[0].mxu0
  %v340 = vadd.f32 %v243, %v339
  %v341 = vpop.f32.mrb[0].mxu0
  %342 = vmatprep.mubr.f32.mxu0 0.0
  %343 = vmatmul.mubr.f32.gmra.mrb[0].mxu0 %v263
  %v344 = vpop.f32.mrb[0].mxu0
  %v345 = vadd.f32 %v248, %v344
  %v346 = vpop.f32.mrb[0].mxu0
  %347 = vmatprep.mubr.f32.mxu0 0.0
  %348 = vmatmul.mubr.f32.gmra.mrb[0].mxu0 %v266
  %v349 = vpop.f32.mrb[0].mxu0
  %v350 = vadd.f32 %v253, %v349
  %v351 = vpop.f32.mrb[0].mxu0
  %352 = vdwg.mxu0
  %v353 = vmax.f32 %v335, 0.0
  %v354 = vmax.f32 %v340, 0.0
  %v355 = vmax.f32 %v345, 0.0
  %v356 = vmax.f32 %v350, 0.0
  %v357 = vld [vmem:[%s5] sm:$0xff]
  %v358 = vld [vmem:[%s5 + $0x8] sm:$0xff]
  %v359 = vld [vmem:[%s6] sm:$0xff]
  %v360 = vld [vmem:[%s6 + $0x8] sm:$0xff]
  %362 = vset.pattern.permute.xlu0 0
  %363 = vperm.xlu0 %362, %v359
  %v364 = vpop.permute.xlu0 %363
  %367 = vset.pattern.permute.xlu0 0
  %368 = vperm.xlu0 %367, %v360
  %v369 = vpop.permute.xlu0 %368
  %vm371 = vcmask 261120
  %v373 = vsel %vm371, %v357, 0
  %v376 = vsel %vm371, %v358, 0
  %378 = vmatprep.subr.mxu0 0.0
  %379 = vmatpush1.msra.mxu0 %v353
  %380 = vmatprep.subr.mxu0 0.0
  %381 = vmatpush1.msra.mxu0 %v354
  %382 = vmatprep.subr.mxu0 0.0
  %383 = vmatpush1.msra.mxu0 %v355
  %384 = vmatprep.subr.mxu0 0.0
  %385 = vmatpush1.msra.mxu0 %v356
  %386 = vmatprep.subr.mxu0 0.0
  %387 = vmatpush1.msra.mxu0 0.0
  %388 = vmatprep.subr.mxu0 0.0
  %389 = vmatpush1.msra.mxu0 0.0
  %390 = vmatprep.subr.mxu0 0.0
  %391 = vmatpush1.msra.mxu0 0.0
  %392 = vmatprep.subr.mxu0 0.0
  %393 = vmatpush1.msra.mxu0 0.0
  %394 = vmatprep.subr.mxu0 0.0
  %395 = vmatpush1.msra.mxu0 0.0
  %396 = vmatprep.subr.mxu0 0.0
  %397 = vmatpush1.msra.mxu0 0.0
  %398 = vmatprep.subr.mxu0 0.0
  %399 = vmatpush1.msra.mxu0 0.0
  %400 = vmatprep.subr.mxu0 0.0
  %401 = vmatpush1.msra.mxu0 0.0
  %402 = vmatprep.subr.mxu0 0.0
  %403 = vmatpush1.msra.mxu0 0.0
  %404 = vmatprep.subr.mxu0 0.0
  %405 = vmatpush1.msra.mxu0 0.0
  %406 = vmatprep.subr.mxu0 0.0
  %407 = vmatpush1.msra.mxu0 0.0
  %408 = vmatprep.subr.mxu0 0.0
  %409 = vmatpush1.msra.mxu0 0.0
  %410 = vmatprep.subr.mxu0 0.0
  %411 = vmatpush1.msra.mxu0 0.0
  %412 = vmatprep.subr.mxu0 0.0
  %413 = vmatpush1.msra.mxu0 0.0
  %414 = vmatprep.subr.mxu0 0.0
  %415 = vmatpush1.msra.mxu0 0.0
  %416 = vmatprep.subr.mxu0 0.0
  %417 = vmatpush1.msra.mxu0 0.0
  %418 = vmatprep.subr.mxu0 0.0
  %419 = vmatpush1.msra.mxu0 0.0
  %420 = vmatprep.subr.mxu0 0.0
  %421 = vmatpush1.msra.mxu0 0.0
  %422 = vmatprep.subr.mxu0 0.0
  %423 = vmatpush1.msra.mxu0 0.0
  %424 = vmatprep.subr.mxu0 0.0
  %425 = vmatpush1.msra.mxu0 0.0
  %426 = vmatprep.subr.mxu0 0.0
  %427 = vmatpush1.msra.mxu0 0.0
  %428 = vmatprep.subr.mxu0 0.0
  %429 = vmatpush1.msra.mxu0 0.0
  %430 = vmatprep.subr.mxu0 0.0
  %431 = vmatpush1.msra.mxu0 0.0
  %432 = vmatprep.subr.mxu0 0.0
  %433 = vmatpush1.msra.mxu0 0.0
  %434 = vmatprep.subr.mxu0 0.0
  %435 = vmatpush1.msra.mxu0 0.0
  %436 = vmatprep.subr.mxu0 0.0
  %437 = vmatpush1.msra.mxu0 0.0
  %438 = vmatprep.subr.mxu0 0.0
  %439 = vmatpush1.msra.mxu0 0.0
  %440 = vmatprep.subr.mxu0 0.0
  %441 = vmatpush1.msra.mxu0 0.0
  %442 = vmatprep.mubr.f32.mxu0 0.0
  %443 = vmatmul.mubr.f32.gmra.mrb[0].mxu0 %v373
  %v444 = vpop.f32.mrb[0].mxu0
  %v445 = vadd.f32 %v364, %v444
  %v446 = vpop.f32.mrb[0].mxu0
  %447 = vmatprep.mubr.f32.mxu0 0.0
  %448 = vmatmul.mubr.f32.gmra.mrb[0].mxu0 %v376
  %v449 = vpop.f32.mrb[0].mxu0
  %v450 = vadd.f32 %v369, %v449
  %v451 = vpop.f32.mrb[0].mxu0
  %452 = vdwg.mxu0
  %vm453 = vcmask 64512
  %454 = vst.msk [vmem:[%s7] sm:$0xff] %vm453, %v445
  %455 = vst.msk [vmem:[%s7 + $0x8] sm:$0xff] %vm453, %v450
  // Predicated region
  $region30: #{nest_mlp_fm.1} parent=0 // pred_check
    _
  $region31: #{nest_mlp_fm.1} parent=0 // pred_check_branch
    %457 = sbr.rel (0) target = $region33
  $region32: #{nest_mlp_fm.1} parent=0 // pred_region
    _
  $region33: #{nest_mlp_fm.1} parent=0 // pred_fallthru
    _
  // Predicated region
  $region34: #{nest_mlp_fm.1} parent=0 // pred_check
    _
  $region35: #{nest_mlp_fm.1} parent=0 // pred_check_branch
    %459 = sbr.rel (0) target = $region37
  $region36: #{nest_mlp_fm.1} parent=0 // pred_region
    _
  $region37: #{nest_mlp_fm.1} parent=0 // pred_fallthru
    _

</llo_original>
